<compile_context>
chip_gen: v6e
topology: v6e:2x2x1
jax: 0.10.0
libtpu: 0.0.40
codegen_flags: <defaults>
</compile_context>

<pallas_src>
import jax
import jax.numpy as jnp
from jax.experimental import pallas as pl
from jax.experimental.pallas import tpu as pltpu


# ---------------------------------------------------------------------------
# Kernel
# ---------------------------------------------------------------------------
def _normalize_kernel(x_ref, mean_ref, inv_std_ref, o_ref):
    # x_ref:       (rows, tile)  image tile, lanes = spatial axis
    # mean_ref:    (rows, 1)     per-row mean   (float32, resident across grid)
    # inv_std_ref: (rows, 1)     per-row 1/std  (float32, resident across grid)
    x = x_ref[...].astype(jnp.float32)
    o_ref[...] = ((x - mean_ref[...]) * inv_std_ref[...]).astype(o_ref.dtype)


# ---------------------------------------------------------------------------
# Helpers
# ---------------------------------------------------------------------------
def _choose_tile_cols(rows, cols, itemsize, max_block_bytes):
    """Largest lane-tile (multiple of 128) whose block fits the byte budget.

    Keeping 2 buffers x (input + output) x block well inside the scoped VMEM
    budget keeps this kernel compiling on v7x (64 MiB VMEM) while still using
    large (>=512 lane) tiles that reach ~85% of HBM roofline on v5e/v6e.
    """
    max_lanes = max(128, (max_block_bytes // max(1, rows * itemsize)) // 128 * 128)
    if cols <= max_lanes:
        return cols                      # full extent: always a legal block
    t = max_lanes
    while t >= 128:
        if cols % t == 0:                # prefer exact division: no masked tail
            return t
        t -= 128
    return max_lanes                     # ragged tail: Pallas masks the last block


# ---------------------------------------------------------------------------
# Wrappers
# ---------------------------------------------------------------------------
def normalization_forward(imgs):
    """Exact forward semantics of the PyTorch module: identity.

    Per the perf review, no Pallas call (and no HBM round-trip) is emitted for
    this path; it is a pure pass-through.
    """
    return imgs


def normalize_images(imgs, mean, std, *, max_block_bytes=4 * 1024 * 1024):
    """Pallas kernel for the module's (unreachable) `(imgs - mean) / std` path.

    imgs: (N, C, H, W); mean, std: (C,) per-channel parameters.
    """
    n, c, h, w = imgs.shape
    hw = h * w
    itemsize = jnp.dtype(imgs.dtype).itemsize

    # Parameters in float32 regardless of image dtype (precision of 1/std).
    mean_f32 = mean.astype(jnp.float32)
    inv_std_f32 = 1.0 / std.astype(jnp.float32)

    # Pick a lane-dense 2-D slab layout (last dim multiple of 128 if possible).
    if hw % 128 == 0 or hw < 128:
        rows, cols = n * c, hw
        mean_rows = jnp.tile(mean_f32, (n,))
        inv_rows = jnp.tile(inv_std_f32, (n,))
    elif w % 128 == 0:
        rows, cols = n * c * h, w
        mean_rows = jnp.tile(jnp.repeat(mean_f32, h), (n,))
        inv_rows = jnp.tile(jnp.repeat(inv_std_f32, h), (n,))
    else:
        # TODO(synk): ragged lane axis -> masked partial stores (correct, slower).
        rows, cols = n * c, hw
        mean_rows = jnp.tile(mean_f32, (n,))
        inv_rows = jnp.tile(inv_std_f32, (n,))

    x2d = imgs.reshape(rows, cols)
    mean_2d = mean_rows.reshape(rows, 1)
    inv_2d = inv_rows.reshape(rows, 1)

    tile = _choose_tile_cols(rows, cols, itemsize, max_block_bytes)
    grid = (pl.cdiv(cols, tile),)

    out2d = pl.pallas_call(
        _normalize_kernel,
        out_shape=jax.ShapeDtypeStruct((rows, cols), imgs.dtype),
        grid=grid,
        in_specs=[
            pl.BlockSpec((rows, tile), lambda i: (0, i)),
            pl.BlockSpec((rows, 1), lambda i: (0, 0)),   # resident across grid
            pl.BlockSpec((rows, 1), lambda i: (0, 0)),   # resident across grid
        ],
        out_specs=pl.BlockSpec((rows, tile), lambda i: (0, i)),
        compiler_params=pltpu.CompilerParams(
            dimension_semantics=("parallel",),           # 2x on v7x, free elsewhere
            vmem_limit_bytes=32 * 1024 * 1024,
        ),
    )(x2d, mean_2d, inv_2d)
    return out2d.reshape(n, c, h, w)


# ---------------------------------------------------------------------------
# Main
# ---------------------------------------------------------------------------
if __name__ == "__main__":
    key = jax.random.PRNGKey(0)
    N, C, H, W = 2, 4, 16, 16                      # NCHW, small synthetic shapes
    imgs = jax.random.uniform(key, (N, C, H, W), dtype=jnp.float32)

    # Deterministic per-channel parameters (module __init__ takes mean/std).
    mean = jnp.asarray([0.485, 0.456, 0.406, 0.5][:C], dtype=jnp.float32)
    std = jnp.asarray([0.229, 0.224, 0.225, 0.25][:C], dtype=jnp.float32)

    # Exact forward semantics: identity (no Pallas call, per perf review).
    out = normalization_forward(imgs)
    out = jax.block_until_ready(out)
    assert out.shape == imgs.shape and out.dtype == imgs.dtype
    assert jnp.array_equal(out, imgs)

    ref = (imgs - mean.reshape(1, C, 1, 1)) / std.reshape(1, C, 1, 1)

    # Pallas normalization kernel, single-block case (whole slab fits a tile).
    norm_out = jax.block_until_ready(normalize_images(imgs, mean, std))
    assert norm_out.shape == imgs.shape and norm_out.dtype == imgs.dtype
    assert jnp.allclose(norm_out, ref, atol=1e-6, rtol=1e-6)

    # Same kernel with a small block budget to exercise the multi-step,
    # double-buffered grid path (tile=128 lanes -> grid=(2,)) with resident
    # mean / inv_std blocks.
    norm_out_tiled = jax.block_until_ready(
        normalize_images(imgs, mean, std, max_block_bytes=4096)
    )
    assert jnp.allclose(norm_out_tiled, ref, atol=1e-6, rtol=1e-6)

    print("KERNEL_OK")
</pallas_src>

<mosaic_0001>
module attributes {stable_mosaic.version = 11 : i64} {
  func.func @_normalize_kernel(%arg0: i32, %arg1: memref<8x256xf32, #tpu.memory_space<vmem>>, %arg2: memref<8x1xf32, #tpu.memory_space<vmem>>, %arg3: memref<8x1xf32, #tpu.memory_space<vmem>>, %arg4: memref<8x256xf32, #tpu.memory_space<vmem>>) attributes {dimension_semantics = [#tpu.dimension_semantics<parallel>], iteration_bounds = array<i64: 1>, scalar_prefetch = 0 : i64, scratch_operands = 0 : i64, tpu.core_type = #tpu.core_type<tc>, window_params = [{transform_indices = @transform_0, window_bounds = array<i64: 8, 256>}, {pipeline_mode = #tpu.pipeline_mode<synchronous>, transform_indices = @transform_1, window_bounds = array<i64: 8, 1>}, {pipeline_mode = #tpu.pipeline_mode<synchronous>, transform_indices = @transform_2, window_bounds = array<i64: 8, 1>}, {transform_indices = @transform_3, window_bounds = array<i64: 8, 256>}]} {
    %c0 = arith.constant 0 : index
    %c0_0 = arith.constant 0 : index
    %0 = vector.load %arg1[%c0, %c0_0] : memref<8x256xf32, #tpu.memory_space<vmem>>, vector<8x256xf32>
    %c0_1 = arith.constant 0 : index
    %c0_2 = arith.constant 0 : index
    %1 = vector.load %arg2[%c0_1, %c0_2] : memref<8x1xf32, #tpu.memory_space<vmem>>, vector<8x1xf32>
    %2 = vector.broadcast %1 : vector<8x1xf32> to vector<8x256xf32>
    %3 = arith.subf %0, %2 : vector<8x256xf32>
    %c0_3 = arith.constant 0 : index
    %c0_4 = arith.constant 0 : index
    %4 = vector.load %arg3[%c0_3, %c0_4] : memref<8x1xf32, #tpu.memory_space<vmem>>, vector<8x1xf32>
    %5 = vector.broadcast %4 : vector<8x1xf32> to vector<8x256xf32>
    %6 = arith.mulf %3, %5 : vector<8x256xf32>
    %c0_5 = arith.constant 0 : index
    %c0_6 = arith.constant 0 : index
    %7 = vector.load %arg4[%c0_5, %c0_6] : memref<8x256xf32, #tpu.memory_space<vmem>>, vector<8x256xf32>
    tpu.vector_store %arg4[%c0_5, %c0_6], %6 {strides = array<i32>} : memref<8x256xf32, #tpu.memory_space<vmem>>, vector<8x256xf32>,
    return
  }
  func.func @transform_0(%arg0: i32) -> (i32, i32) {
    %c0_i32 = arith.constant 0 : i32
    %c0_i32_0 = arith.constant 0 : i32
    return %c0_i32, %arg0 : i32, i32
  }
  func.func @transform_1(%arg0: i32) -> (i32, i32) {
    %c0_i32 = arith.constant 0 : i32
    %c0_i32_0 = arith.constant 0 : i32
    %c0_i32_1 = arith.constant 0 : i32
    return %c0_i32, %c0_i32_0 : i32, i32
  }
  func.func @transform_2(%arg0: i32) -> (i32, i32) {
    %c0_i32 = arith.constant 0 : i32
    %c0_i32_0 = arith.constant 0 : i32
    %c0_i32_1 = arith.constant 0 : i32
    return %c0_i32, %c0_i32_0 : i32, i32
  }
  func.func @transform_3(%arg0: i32) -> (i32, i32) {
    %c0_i32 = arith.constant 0 : i32
    %c0_i32_0 = arith.constant 0 : i32
    return %c0_i32, %arg0 : i32, i32
  }
}

</mosaic_0001>

<llo_original>
// kernel: tpu_custom_call.1
$region0: #{tpu_custom_call.1}
  #allocation0 [shape = 'u32[]', space=smem, size = 0x4, offset = 0x4, fixed_abs, tag = 'smem constant byte address 0x4 - core index']
  #allocation1 [shape = 'u32[144,128]{1,0:T(1,128)}', space=vmem, size = 0x12000, scoped, tag = 'internal scratch']
  %s0 = inlined_call_operand.vmem [shape: f32[8,256], index: 0, kind: input, shape index: {}]
  %s1 = inlined_call_operand.vmem [shape: f32[8,1], index: 1, kind: input, shape index: {}]
  %s2 = inlined_call_operand.vmem [shape: f32[8,1], index: 2, kind: input, shape index: {}]
  %s3 = inlined_call_operand.hbm [shape: f32[8,256], index: 3, kind: output, shape index: {}]
  %s4 = sld [smem:[#allocation0]]
  $region22: #{tpu_custom_call.1} parent=0
    _
  %s6 = ssub.s32 1, %s4
  %s7 = scalar_select 0, %s6, %s4
  $region1: #{tpu_custom_call.1} parent=0
    #allocation2 [shape = 'u8[8192]{0}', space=vmem, size = 0x2000, scoped, tag = 'output window, operand 0, single buffered']
    #allocation3 [shape = 's32[1]{0}', space=sflag, size = 0x4, scoped, tag = 'scoped memory for tpu_custom_call.1']
    %8 = vsyncpa [#allocation3], 0
    // Predicated region
    $region2: #{tpu_custom_call.1} parent=1 // pred_check
      _
    $region3: #{tpu_custom_call.1} parent=1 // pred_check_branch
      %10 = sbr.rel (0) target = $region5
    $region4: #{tpu_custom_call.1} parent=1 // pred_region
      _
    $region5: #{tpu_custom_call.1} parent=1 // pred_fallthru
      _
    // Predicated region
    $region6: #{tpu_custom_call.1} parent=1 // pred_check
      _
    $region7: #{tpu_custom_call.1} parent=1 // pred_check_branch
      %12 = sbr.rel (0) target = $region9
    $region8: #{tpu_custom_call.1} parent=1 // pred_region
      _
    $region9: #{tpu_custom_call.1} parent=1 // pred_fallthru
      _
    // Predicated region
    $region10: #{tpu_custom_call.1} parent=1 // pred_check
      _
    $region11: #{tpu_custom_call.1} parent=1 // pred_check_branch
      %14 = sbr.rel (0) target = $region13
    $region12: #{tpu_custom_call.1} parent=1 // pred_region
      _
    $region13: #{tpu_custom_call.1} parent=1 // pred_fallthru
      _
    %v15 = vld [vmem:[%s0] sm:$0xff]
    %v16 = vld [vmem:[%s0 + $0x8] sm:$0xff]
    %v17 = vld [vmem:[%s1] sm:$0xff]
    %19 = vset.pattern.permute.xlu0 0
    %20 = vperm.xlu0 %19, %v17
    %v21 = vpop.permute.xlu0 %20
    %v23 = vsub.f32 %v15, %v21
    %v24 = vsub.f32 %v16, %v21
    %v25 = vld [vmem:[%s2] sm:$0xff]
    %27 = vset.pattern.permute.xlu0 0
    %28 = vperm.xlu0 %27, %v25
    %v29 = vpop.permute.xlu0 %28
    %v31 = vmul.f32 %v23, %v29
    %v32 = vmul.f32 %v24, %v29
    %33 = vst [vmem:[#allocation2] sm:$0xff] %v31
    %34 = vst [vmem:[#allocation2 + $0x8] sm:$0xff] %v32
    // Predicated region
    $region14: #{tpu_custom_call.1} parent=1 // pred_check
      _
    $region15: #{tpu_custom_call.1} parent=1 // pred_check_branch
      %36 = sbr.rel (0) target = $region17
    $region16: #{tpu_custom_call.1} parent=1 // pred_region
      %s38 = ssub.s32 256, 256
      %39 = vsyncadd [#allocation3], %s38
      %s41 = sshll.u32 [#allocation2], 4
      %s42 = int_to_ptr.vmem [resolvable:$true] %s41
      %44 = dma.vmem_to_hbm [thread:$0]  %s42, 256, %s3, [#allocation3]
    $region17: #{tpu_custom_call.1} parent=1 // pred_fallthru
      _
    // Predicated region
    $region18: #{tpu_custom_call.1} parent=1 // pred_check
      _
    $region19: #{tpu_custom_call.1} parent=1 // pred_check_branch
      %46 = sbr.rel (0) target = $region21
    $region20: #{tpu_custom_call.1} parent=1 // pred_region
      %47 = dma.done [#allocation3], 256
    $region21: #{tpu_custom_call.1} parent=1 // pred_fallthru
      _
    %48 = vsyncpa [#allocation3], 1

</llo_original>
